<compile_context>
chip_gen: v6e
topology: v6e:2x2x1
jax: 0.10.0
libtpu: 0.0.40
codegen_flags: <defaults>
</compile_context>

<pallas_src>
import jax
import jax.numpy as jnp
from jax import lax
from jax.experimental import pallas as pl
from jax.experimental.pallas import tpu as pltpu

_LANE = 128


def _round_up(x: int, m: int) -> int:
    return (x + m - 1) // m * m


def _sublanes(itemsize: int) -> int:
    # rows per vreg: 8 for 32-bit, 16 for 16-bit, 32 for 8-bit dtypes
    return max(8, 8 * (4 // max(1, itemsize)))


def _vmem_capacity_bytes() -> int:
    try:
        return int(pltpu.get_tpu_info().vmem_capacity_bytes)
    except Exception:
        return 64 * 1024 * 1024  # conservative: v7x per-TensorCore VMEM


def _block_vmem_bytes(tb, S, H, itemsize, sublane, use_vpu):
    """Padded VMEM footprint of one grid step: double-buffered operands and
    outputs plus f32 intermediates. Assumes tb is sublane-aligned (affine in tb)."""
    hp = _round_up(H, _LANE)
    sp_lane = _round_up(S, _LANE)
    s_sub = _round_up(S, sublane)
    tb_sub = _round_up(tb, sublane)
    x_blk = tb * s_sub * hp * itemsize              # (tb, S, H) sequence tile
    last_blk = tb_sub * hp * itemsize               # (tb, H) last-timestep tile
    w_blk = _round_up(H, sublane) * hp * itemsize   # (H, H) shared W^T
    ctx_blk = tb_sub * hp * itemsize                # (tb, Hp) output
    attw_blk = tb_sub * sp_lane * itemsize          # (tb, Sp) output
    f32_small = 3 * _round_up(tb, 8) * sp_lane * 4  # scores / exp / weights
    # VPU path materializes (tb, S, H) f32 products for both contractions.
    f32_big = (2 if use_vpu else 1) * tb * _round_up(S, 8) * hp * 4
    return 2 * (x_blk + last_blk + w_blk + ctx_blk + attw_blk) + f32_small + f32_big


def _self_attention_kernel(x_ref, last_ref, wt_ref, ctx_ref, attw_ref):
    x = x_ref[...]        # (TB, S, H) native dtype — streamed once, reused twice
    last = last_ref[...]  # (TB, H)    native dtype (dedicated dense block)
    wt = wt_ref[...]      # (H, H) = W^T (pre-transposed in the wrapper)

    tb, s_len, h = x.shape

    # Linear projection of the last hidden state: a real (TB,H)x(H,H) MXU
    # matmul with f32 accumulation.
    wh = jnp.dot(last, wt, preferred_element_type=jnp.float32)    # (TB, H) f32

    if h <= _LANE:
        # Small contraction dim: a batched dot_general lowers to per-batch
        # matvecs (one MXU push/pop per row, tiny column utilization); do the
        # score contraction on the VPU (mul) + XLU (lane reduce) instead.
        prod = x * wh.astype(x.dtype)[:, None, :]                 # (TB, S, H)
        scores = jnp.sum(prod.astype(jnp.float32), axis=-1)       # (TB, S) f32
    else:
        scores = lax.dot_general(
            x, wh.astype(x.dtype),
            dimension_numbers=(((2,), (1,)), ((0,), (0,))),
            preferred_element_type=jnp.float32)

    # Softmax over the sequence axis, exact (the weights are a user-visible
    # output and must sum to 1).
    m = jnp.max(scores, axis=-1, keepdims=True)
    e = jnp.exp(scores - m)
    weights = e / jnp.sum(e, axis=-1, keepdims=True)              # (TB, S) f32

    if h <= _LANE:
        ctxp = x * weights.astype(x.dtype)[:, :, None]            # (TB, S, H)
        context = jnp.sum(ctxp.astype(jnp.float32), axis=1)       # (TB, H) f32
    else:
        context = lax.dot_general(
            weights.astype(x.dtype), x,
            dimension_numbers=(((1,), (1,)), ((0,), (0,))),
            preferred_element_type=jnp.float32)

    # Lane-dense stores: output refs are padded to a multiple of 128 lanes so
    # the writes are full (unmasked) vector stores; the wrapper slices the
    # padding off.
    pad_h = ctx_ref.shape[-1] - h
    if pad_h:
        context = jnp.concatenate(
            [context, jnp.zeros((context.shape[0], pad_h), context.dtype)], axis=-1)
    pad_s = attw_ref.shape[-1] - s_len
    if pad_s:
        weights = jnp.concatenate(
            [weights, jnp.zeros((weights.shape[0], pad_s), weights.dtype)], axis=-1)

    ctx_ref[...] = context.astype(ctx_ref.dtype)
    attw_ref[...] = weights.astype(attw_ref.dtype)


def self_attention(lstm_outputs: jax.Array, w: jax.Array, *, tb: int | None = None):
    """lstm_outputs: (B, S, H); w: (H, H) nn.Linear weight (out, in), no bias.
    Returns (context_vector (B, H), attention_weights (B, S))."""
    B, S, H = lstm_outputs.shape
    dtype = lstm_outputs.dtype
    itemsize = jnp.dtype(dtype).itemsize
    sublane = _sublanes(itemsize)
    use_vpu = H <= _LANE

    hp_out = _round_up(H, _LANE)   # lane-dense context output width
    sp_out = _round_up(S, _LANE)   # lane-dense weights output width

    # Scoped VMEM limit from the chip's capacity; block budget leaves headroom
    # for Mosaic internal scratch (v7x: 48 MiB limit / ~41 MiB of blocks,
    # 128 MiB parts: 96 MiB / ~82 MiB).
    vmem_cap = _vmem_capacity_bytes()
    vmem_limit = int(vmem_cap * 0.75)
    block_budget = int(vmem_limit * 0.85)

    if tb is None:
        if B <= sublane:
            tb = B                           # single tiny block (grid of 1)
        else:
            # Keep at least 2 grid steps: megacore sharding on v7x + the
            # prefetch(i+1)/writeback(i-1) pipeline need >1 step.
            tb_cap = _round_up((B + 1) // 2, sublane)
            # Largest sublane-aligned tb whose *padded* footprint fits.
            lo = _block_vmem_bytes(sublane, S, H, itemsize, sublane, use_vpu)
            hi = _block_vmem_bytes(2 * sublane, S, H, itemsize, sublane, use_vpu)
            per_row = max(1, (hi - lo) // sublane)
            base = lo - per_row * sublane
            tb = (block_budget - base) // per_row
            tb = max(sublane, min(tb_cap, (tb // sublane) * sublane))
            while (tb > sublane and
                   _block_vmem_bytes(tb, S, H, itemsize, sublane, use_vpu) > block_budget):
                tb -= sublane
            # TODO(synk): if even a `sublane`-row block exceeds the budget
            # (extremely long S*H), add a second "arbitrary" grid axis over S
            # with an online-softmax accumulator instead of shrinking further.
    else:
        tb = min(tb, B)
        if tb < B:
            tb = max(sublane, (tb // sublane) * sublane)

    n_blocks = pl.cdiv(B, tb)
    b_pad = n_blocks * tb

    x = lstm_outputs
    last = lstm_outputs[:, -1, :]              # (B, H) — dedicated dense operand
    if b_pad != B:
        x = jnp.pad(x, ((0, b_pad - B), (0, 0), (0, 0)))
        last = jnp.pad(last, ((0, b_pad - B), (0, 0)))

    wt = w.T                                   # Linear(y) = y @ W^T = y @ wt

    grid_spec = pltpu.PrefetchScalarGridSpec(
        num_scalar_prefetch=0,
        grid=(n_blocks,),
        in_specs=[
            pl.BlockSpec((tb, S, H), lambda b: (b, 0, 0)),   # sequence slab
            pl.BlockSpec((tb, H), lambda b: (b, 0)),         # last timestep
            pl.BlockSpec((H, H), lambda b: (0, 0)),          # shared W^T
        ],
        out_specs=[
            pl.BlockSpec((tb, hp_out), lambda b: (b, 0)),    # context (lane-padded)
            pl.BlockSpec((tb, sp_out), lambda b: (b, 0)),    # weights (lane-padded)
        ],
    )

    ctx, attw = pl.pallas_call(
        _self_attention_kernel,
        out_shape=(
            jax.ShapeDtypeStruct((b_pad, hp_out), dtype),
            jax.ShapeDtypeStruct((b_pad, sp_out), dtype),
        ),
        grid_spec=grid_spec,
        compiler_params=pltpu.CompilerParams(
            dimension_semantics=("parallel",),   # shard batch blocks across TCs
            vmem_limit_bytes=vmem_limit,
        ),
    )(x, last, wt)

    return ctx[:B, :H], attw[:B, :S]


def self_attention_ref(lstm_outputs, w):
    """Plain-JAX reference mirroring the PyTorch forward."""
    last = lstm_outputs[:, -1, :]                          # (B, H)
    wh = jnp.dot(last, w.T)                                # (B, H) == Linear(last)
    scores = jnp.einsum("bsh,bh->bs", lstm_outputs, wh)    # (B, S)
    weights = jax.nn.softmax(scores, axis=1)               # (B, S)
    context = jnp.einsum("bsh,bs->bh", lstm_outputs, weights)
    return context, weights


if __name__ == "__main__":
    # Full-precision f32 matmuls everywhere so kernel and reference agree.
    jax.config.update("jax_default_matmul_precision", "highest")

    key = jax.random.PRNGKey(0)
    k_x, k_w, k_x2, k_x3 = jax.random.split(key, 4)

    # Small shapes consistent with the module: batch=2, seq=8, hidden=32.
    B, S, H = 2, 8, 32
    lstm_outputs = jax.random.normal(k_x, (B, S, H), dtype=jnp.float32)
    bound = 1.0 / (H ** 0.5)
    w = jax.random.uniform(k_w, (H, H), dtype=jnp.float32, minval=-bound, maxval=bound)

    ctx, attw = self_attention(lstm_outputs, w)
    ctx = jax.block_until_ready(ctx)
    attw = jax.block_until_ready(attw)

    ctx_ref, attw_ref = self_attention_ref(lstm_outputs, w)
    assert ctx.shape == (B, H) and attw.shape == (B, S)
    assert jnp.allclose(ctx, ctx_ref, atol=1e-3, rtol=1e-3)
    assert jnp.allclose(attw, attw_ref, atol=1e-3, rtol=1e-3)
    assert jnp.allclose(jnp.sum(attw, axis=1), 1.0, atol=1e-5)

    # Multi-block + batch-padding path (grid > 1, TB=8, B=12 -> pad to 16).
    B2 = 12
    x2 = jax.random.normal(k_x2, (B2, S, H), dtype=jnp.float32)
    ctx2, attw2 = self_attention(x2, w, tb=8)
    ctx2 = jax.block_until_ready(ctx2)
    attw2 = jax.block_until_ready(attw2)
    ctx2_ref, attw2_ref = self_attention_ref(x2, w)
    assert ctx2.shape == (B2, H) and attw2.shape == (B2, S)
    assert jnp.allclose(ctx2, ctx2_ref, atol=1e-3, rtol=1e-3)
    assert jnp.allclose(attw2, attw2_ref, atol=1e-3, rtol=1e-3)

    # Automatic tiling path (B > sublane -> >= 2 grid steps, VMEM-budgeted tb).
    B3 = 64
    x3 = jax.random.normal(k_x3, (B3, S, H), dtype=jnp.float32)
    ctx3, attw3 = self_attention(x3, w)
    ctx3 = jax.block_until_ready(ctx3)
    attw3 = jax.block_until_ready(attw3)
    ctx3_ref, attw3_ref = self_attention_ref(x3, w)
    assert ctx3.shape == (B3, H) and attw3.shape == (B3, S)
    assert jnp.allclose(ctx3, ctx3_ref, atol=1e-3, rtol=1e-3)
    assert jnp.allclose(attw3, attw3_ref, atol=1e-3, rtol=1e-3)

    print("KERNEL_OK")
</pallas_src>

<mosaic_0001>
module attributes {stable_mosaic.version = 11 : i64} {
  func.func @_self_attention_kernel(%arg0: i32, %arg1: memref<2x8x32xf32, #tpu.memory_space<vmem>>, %arg2: memref<2x32xf32, #tpu.memory_space<vmem>>, %arg3: memref<32x32xf32, #tpu.memory_space<vmem>>, %arg4: memref<2x128xf32, #tpu.memory_space<vmem>>, %arg5: memref<2x128xf32, #tpu.memory_space<vmem>>) attributes {dimension_semantics = [#tpu.dimension_semantics<parallel>], iteration_bounds = array<i64: 1>, scalar_prefetch = 0 : i64, scratch_operands = 0 : i64, tpu.core_type = #tpu.core_type<tc>, window_params = [{transform_indices = @transform_0, window_bounds = array<i64: 2, 8, 32>}, {transform_indices = @transform_1, window_bounds = array<i64: 2, 32>}, {pipeline_mode = #tpu.pipeline_mode<synchronous>, transform_indices = @transform_2, window_bounds = array<i64: 32, 32>}, {transform_indices = @transform_3, window_bounds = array<i64: 2, 128>}, {transform_indices = @transform_4, window_bounds = array<i64: 2, 128>}]} {
    %c0 = arith.constant 0 : index
    %c0_0 = arith.constant 0 : index
    %c0_1 = arith.constant 0 : index
    %0 = vector.load %arg1[%c0, %c0_0, %c0_1] : memref<2x8x32xf32, #tpu.memory_space<vmem>>, vector<2x8x32xf32>
    %c0_2 = arith.constant 0 : index
    %c0_3 = arith.constant 0 : index
    %1 = vector.load %arg2[%c0_2, %c0_3] : memref<2x32xf32, #tpu.memory_space<vmem>>, vector<2x32xf32>
    %c0_4 = arith.constant 0 : index
    %c0_5 = arith.constant 0 : index
    %2 = vector.load %arg3[%c0_4, %c0_5] : memref<32x32xf32, #tpu.memory_space<vmem>>, vector<32x32xf32>
    %cst = arith.constant dense<0.000000e+00> : vector<2x32xf32>
    %3 = tpu.matmul %1, %2, %cst {dimension_numbers = #tpu.dot_dimension_numbers<[1], [0], [0], [1], [0, 0, 1, 1], [], []>, precision = #tpu.contract_precision<fp32>} : vector<2x32xf32>, vector<32x32xf32>, vector<2x32xf32> -> vector<2x32xf32>
    %4 = vector.shape_cast %3 : vector<2x32xf32> to vector<2x1x32xf32>
    %5 = vector.broadcast %4 : vector<2x1x32xf32> to vector<2x8x32xf32>
    %6 = arith.mulf %0, %5 : vector<2x8x32xf32>
    %cst_6 = arith.constant dense<0.000000e+00> : vector<2x8xf32>
    %7 = vector.multi_reduction <add>, %6, %cst_6 [2] : vector<2x8x32xf32> to vector<2x8xf32>
    %cst_7 = arith.constant dense<0xFF800000> : vector<2xf32>
    %8 = vector.multi_reduction <maximumf>, %7, %cst_7 [1] : vector<2x8xf32> to vector<2xf32>
    %9 = vector.shape_cast %8 : vector<2xf32> to vector<2x1xf32>
    %10 = vector.broadcast %9 : vector<2x1xf32> to vector<2x8xf32>
    %11 = arith.subf %7, %10 : vector<2x8xf32>
    %12 = math.exp %11 : vector<2x8xf32>
    %cst_8 = arith.constant dense<0.000000e+00> : vector<2xf32>
    %13 = vector.multi_reduction <add>, %12, %cst_8 [1] : vector<2x8xf32> to vector<2xf32>
    %14 = vector.shape_cast %13 : vector<2xf32> to vector<2x1xf32>
    %15 = vector.broadcast %14 : vector<2x1xf32> to vector<2x8xf32>
    %16 = arith.divf %12, %15 : vector<2x8xf32>
    %17 = vector.shape_cast %16 : vector<2x8xf32> to vector<2x8x1xf32>
    %18 = vector.broadcast %17 : vector<2x8x1xf32> to vector<2x8x32xf32>
    %19 = arith.mulf %0, %18 : vector<2x8x32xf32>
    %cst_9 = arith.constant dense<0.000000e+00> : vector<2x32xf32>
    %20 = vector.multi_reduction <add>, %19, %cst_9 [1] : vector<2x8x32xf32> to vector<2x32xf32>
    %cst_10 = arith.constant 0.000000e+00 : f32
    %21 = vector.broadcast %cst_10 : f32 to vector<2x96xf32>
    %22 = tpu.concatenate %20, %21 in 1 : vector<2x32xf32>, vector<2x96xf32> -> vector<2x128xf32>
    %cst_11 = arith.constant 0.000000e+00 : f32
    %23 = vector.broadcast %cst_11 : f32 to vector<2x120xf32>
    %24 = tpu.concatenate %16, %23 in 1 : vector<2x8xf32>, vector<2x120xf32> -> vector<2x128xf32>
    %c0_12 = arith.constant 0 : index
    %c0_13 = arith.constant 0 : index
    %25 = vector.load %arg4[%c0_12, %c0_13] : memref<2x128xf32, #tpu.memory_space<vmem>>, vector<2x128xf32>
    tpu.vector_store %arg4[%c0_12, %c0_13], %22 {strides = array<i32>} : memref<2x128xf32, #tpu.memory_space<vmem>>, vector<2x128xf32>,
    %c0_14 = arith.constant 0 : index
    %c0_15 = arith.constant 0 : index
    %26 = vector.load %arg5[%c0_14, %c0_15] : memref<2x128xf32, #tpu.memory_space<vmem>>, vector<2x128xf32>
    tpu.vector_store %arg5[%c0_14, %c0_15], %24 {strides = array<i32>} : memref<2x128xf32, #tpu.memory_space<vmem>>, vector<2x128xf32>,
    return
  }
  func.func @transform_0(%arg0: i32) -> (i32, i32, i32) {
    %c0_i32 = arith.constant 0 : i32
    %c0_i32_0 = arith.constant 0 : i32
    %c0_i32_1 = arith.constant 0 : i32
    return %arg0, %c0_i32, %c0_i32_0 : i32, i32, i32
  }
  func.func @transform_1(%arg0: i32) -> (i32, i32) {
    %c0_i32 = arith.constant 0 : i32
    %c0_i32_0 = arith.constant 0 : i32
    return %arg0, %c0_i32 : i32, i32
  }
  func.func @transform_2(%arg0: i32) -> (i32, i32) {
    %c0_i32 = arith.constant 0 : i32
    %c0_i32_0 = arith.constant 0 : i32
    %c0_i32_1 = arith.constant 0 : i32
    return %c0_i32, %c0_i32_0 : i32, i32
  }
  func.func @transform_3(%arg0: i32) -> (i32, i32) {
    %c0_i32 = arith.constant 0 : i32
    %c0_i32_0 = arith.constant 0 : i32
    return %arg0, %c0_i32 : i32, i32
  }
  func.func @transform_4(%arg0: i32) -> (i32, i32) {
    %c0_i32 = arith.constant 0 : i32
    %c0_i32_0 = arith.constant 0 : i32
    return %arg0, %c0_i32 : i32, i32
  }
}

</mosaic_0001>

<llo_original>
// kernel: tpu_custom_call.1
$region0: #{tpu_custom_call.1}
  #allocation0 [shape = 'u32[]', space=smem, size = 0x4, offset = 0x4, fixed_abs, tag = 'smem constant byte address 0x4 - core index']
  #allocation1 [shape = 'u32[144,128]{1,0:T(1,128)}', space=vmem, size = 0x12000, scoped, tag = 'internal scratch']
  %s0 = inlined_call_operand.hbm [shape: f32[2,8,32], index: 0, kind: input, shape index: {}]
  %s1 = inlined_call_operand.hbm [shape: f32[2,32], index: 1, kind: input, shape index: {}]
  %s2 = inlined_call_operand.hbm [shape: f32[32,32], index: 2, kind: input, shape index: {}]
  %s3 = inlined_call_operand.hbm [shape: f32[2,128], index: 3, kind: output, shape index: {0}]
  %s4 = inlined_call_operand.hbm [shape: f32[2,128], index: 4, kind: output, shape index: {1}]
  %5 = xla_tuple %s3, %s4
  %s6 = sld [smem:[#allocation0]]
  $region42: #{tpu_custom_call.1} parent=0
    _
  %s8 = ssub.s32 1, %s6
  %s9 = scalar_select 0, %s8, %s6
  $region1: #{tpu_custom_call.1} parent=0
    #allocation2 [shape = 'u8[8192]{0}', space=vmem, size = 0x2000, scoped, tag = 'input window, operand 0, single buffered']
    #allocation3 [shape = 's32[1]{0}', space=sflag, size = 0x4, scoped, tag = 'scoped memory for tpu_custom_call.1']
    #allocation4 [shape = 's32[1]{0}', space=sflag, size = 0x4, scoped, tag = 'scoped memory for tpu_custom_call.1']
    #allocation5 [shape = 'u8[1024]{0}', space=vmem, size = 0x400, scoped, tag = 'input window, operand 1, single buffered']
    #allocation6 [shape = 's32[1]{0}', space=sflag, size = 0x4, scoped, tag = 'scoped memory for tpu_custom_call.1']
    #allocation7 [shape = 'u8[16384]{0}', space=vmem, size = 0x4000, scoped, tag = 'input window, operand 2, single buffered']
    #allocation8 [shape = 'u8[1024]{0}', space=vmem, size = 0x400, scoped, tag = 'output window, operand 0, single buffered']
    #allocation9 [shape = 'u8[1024]{0}', space=vmem, size = 0x400, scoped, tag = 'output window, operand 1, single buffered']
    #allocation10 [shape = 's32[1]{0}', space=sflag, size = 0x4, scoped, tag = 'scoped memory for tpu_custom_call.1']
    %10 = vsyncpa [#allocation3], 0
    %11 = vsyncpa [#allocation6], 0
    %12 = vsyncpa [#allocation4], 0
    %13 = vsyncpa [#allocation10], 0
    // Predicated region
    $region2: #{tpu_custom_call.1} parent=1 // pred_check
      _
    $region3: #{tpu_custom_call.1} parent=1 // pred_check_branch
      %15 = sbr.rel (0) target = $region5
    $region4: #{tpu_custom_call.1} parent=1 // pred_region
      %s17 = ssub.s32 256, 256
      %18 = vsyncadd [#allocation3], %s17
      %s19 = sshll.u32 [#allocation2], 4
      %s20 = int_to_ptr.vmem [resolvable:$true] %s19
      %25 = dma.hbm_to_vmem [thread:$0]  %s0, 256, %s20, [#allocation3], 128, 128, 8
    $region5: #{tpu_custom_call.1} parent=1 // pred_fallthru
      _
    // Predicated region
    $region6: #{tpu_custom_call.1} parent=1 // pred_check
      _
    $region7: #{tpu_custom_call.1} parent=1 // pred_check_branch
      %27 = sbr.rel (0) target = $region9
    $region8: #{tpu_custom_call.1} parent=1 // pred_region
      %s29 = ssub.s32 32, 32
      %30 = vsyncadd [#allocation6], %s29
      %s32 = sshll.u32 [#allocation5], 4
      %s33 = int_to_ptr.vmem [resolvable:$true] %s32
      %35 = dma.hbm_to_vmem [thread:$0]  %s1, 32, %s33, [#allocation6]
    $region9: #{tpu_custom_call.1} parent=1 // pred_fallthru
      _
    // Predicated region
    $region10: #{tpu_custom_call.1} parent=1 // pred_check
      _
    $region11: #{tpu_custom_call.1} parent=1 // pred_check_branch
      %37 = sbr.rel (0) target = $region13
    $region12: #{tpu_custom_call.1} parent=1 // pred_region
      %s39 = ssub.s32 512, 512
      %40 = vsyncadd [#allocation6], %s39
      %s41 = sshll.u32 [#allocation7], 4
      %s42 = int_to_ptr.vmem [resolvable:$true] %s41
      %47 = dma.hbm_to_vmem [thread:$0]  %s2, 512, %s42, [#allocation6], 128, 128, 8
    $region13: #{tpu_custom_call.1} parent=1 // pred_fallthru
      _
    // Predicated region
    $region14: #{tpu_custom_call.1} parent=1 // pred_check
      _
    $region15: #{tpu_custom_call.1} parent=1 // pred_check_branch
      %49 = sbr.rel (0) target = $region17
    $region16: #{tpu_custom_call.1} parent=1 // pred_region
      %50 = dma.done [#allocation3], 256
    $region17: #{tpu_custom_call.1} parent=1 // pred_fallthru
      _
    // Predicated region
    $region18: #{tpu_custom_call.1} parent=1 // pred_check
      _
    $region19: #{tpu_custom_call.1} parent=1 // pred_check_branch
      %52 = sbr.rel (0) target = $region21
    $region20: #{tpu_custom_call.1} parent=1 // pred_region
      %53 = dma.done [#allocation6], 32
    $region21: #{tpu_custom_call.1} parent=1 // pred_fallthru
      _
    // Predicated region
    $region22: #{tpu_custom_call.1} parent=1 // pred_check
      _
    $region23: #{tpu_custom_call.1} parent=1 // pred_check_branch
      %55 = sbr.rel (0) target = $region25
    $region24: #{tpu_custom_call.1} parent=1 // pred_region
      %56 = dma.done [#allocation6], 512
    $region25: #{tpu_custom_call.1} parent=1 // pred_fallthru
      _
    %v57 = vld [vmem:[#allocation2] sm:$0xff]
    %v58 = vld [vmem:[#allocation2 + $0x8] sm:$0xff]
    %v59 = vld [vmem:[#allocation5] sm:$0x3]
    %v60 = vld [vmem:[#allocation7] sm:$0xff]
    %v61 = vld [vmem:[#allocation7 + $0x8] sm:$0xff]
    %v62 = vld [vmem:[#allocation7 + $0x10] sm:$0xff]
    %v63 = vld [vmem:[#allocation7 + $0x18] sm:$0xff]
    %vm64 = vcmask 261120
    %v66 = vsel %vm64, %v59, 0
    %68 = vmatprep.subr.mxu0 0.0
    %69 = vmatpush1.msra.mxu0 0.0
    %70 = vmatprep.subr.mxu0 0.0
    %71 = vmatpush1.msra.mxu0 0.0
    %72 = vmatprep.subr.mxu0 0.0
    %73 = vmatpush1.msra.mxu0 0.0
    %74 = vmatprep.subr.mxu0 0.0
    %75 = vmatpush1.msra.mxu0 0.0
    %76 = vmatprep.subr.mxu0 0.0
    %77 = vmatpush1.msra.mxu0 0.0
    %78 = vmatprep.subr.mxu0 0.0
    %79 = vmatpush1.msra.mxu0 0.0
    %80 = vmatprep.subr.mxu0 0.0
    %81 = vmatpush1.msra.mxu0 0.0
    %82 = vmatprep.subr.mxu0 0.0
    %83 = vmatpush1.msra.mxu0 0.0
    %84 = vmatprep.subr.mxu0 0.0
    %85 = vmatpush1.msra.mxu0 0.0
    %86 = vmatprep.subr.mxu0 0.0
    %87 = vmatpush1.msra.mxu0 0.0
    %88 = vmatprep.subr.mxu0 0.0
    %89 = vmatpush1.msra.mxu0 0.0
    %90 = vmatprep.subr.mxu0 0.0
    %91 = vmatpush1.msra.mxu0 0.0
    %92 = vmatprep.subr.mxu0 0.0
    %v93 = vand.u32 %v63, 4294901760
    %94 = vmatpush1.msra.mxu0 %v93
    %95 = vmatprep.subr.mxu0 0.0
    %v96 = vand.u32 %v62, 4294901760
    %97 = vmatpush1.msra.mxu0 %v96
    %98 = vmatprep.subr.mxu0 0.0
    %v99 = vand.u32 %v61, 4294901760
    %100 = vmatpush1.msra.mxu0 %v99
    %101 = vmatprep.subr.mxu0 0.0
    %v102 = vand.u32 %v60, 4294901760
    %103 = vmatpush1.msra.mxu0 %v102
    %104 = vmatprep.subr.mxu0 0.0
    %105 = vmatpush2.msra.mxu0 0.0
    %106 = vmatprep.subr.mxu0 0.0
    %107 = vmatpush2.msra.mxu0 0.0
    %108 = vmatprep.subr.mxu0 0.0
    %109 = vmatpush2.msra.mxu0 0.0
    %110 = vmatprep.subr.mxu0 0.0
    %111 = vmatpush2.msra.mxu0 0.0
    %112 = vmatprep.subr.mxu0 0.0
    %113 = vmatpush2.msra.mxu0 0.0
    %114 = vmatprep.subr.mxu0 0.0
    %115 = vmatpush2.msra.mxu0 0.0
    %116 = vmatprep.subr.mxu0 0.0
    %117 = vmatpush2.msra.mxu0 0.0
    %118 = vmatprep.subr.mxu0 0.0
    %119 = vmatpush2.msra.mxu0 0.0
    %120 = vmatprep.subr.mxu0 0.0
    %121 = vmatpush2.msra.mxu0 0.0
    %122 = vmatprep.subr.mxu0 0.0
    %123 = vmatpush2.msra.mxu0 0.0
    %124 = vmatprep.subr.mxu0 0.0
    %125 = vmatpush2.msra.mxu0 0.0
    %126 = vmatprep.subr.mxu0 0.0
    %127 = vmatpush2.msra.mxu0 0.0
    %128 = vmatprep.subr.mxu0 0.0
    %129 = vmatpush2.msra.mxu0 0.0
    %130 = vmatprep.subr.mxu0 0.0
    %131 = vmatpush2.msra.mxu0 0.0
    %132 = vmatprep.subr.mxu0 0.0
    %133 = vmatpush2.msra.mxu0 0.0
    %134 = vmatprep.subr.mxu0 0.0
    %135 = vmatpush2.msra.mxu0 0.0
    %136 = vmatprep.mubr.f32.mxu0 0.0
    %v137 = vand.u32 %v66, 4294901760
    %v138 = vsub.f32 %v66, %v137
    %v139 = vand.u32 %v138, 4294901760
    %v140 = vsub.f32 %v138, %v139
    %v141 = vand.u32 %v140, 4294901760
    %142 = vmatmul.mubr.f32.gmra.mxu0 %v141
    %v143 = vpop.f32.mrf.mxu0
    %v144 = vadd.f32 0.0, %v143
    %v145 = vpop.f32.mrf.mxu0
    %146 = vdwg.mxu0
    %147 = vmatprep.subr.mxu0 0.0
    %148 = vmatpush1.msra.mxu0 0.0
    %149 = vmatprep.subr.mxu0 0.0
    %150 = vmatpush1.msra.mxu0 0.0
    %151 = vmatprep.subr.mxu0 0.0
    %152 = vmatpush1.msra.mxu0 0.0
    %153 = vmatprep.subr.mxu0 0.0
    %154 = vmatpush1.msra.mxu0 0.0
    %155 = vmatprep.subr.mxu0 0.0
    %156 = vmatpush1.msra.mxu0 0.0
    %157 = vmatprep.subr.mxu0 0.0
    %158 = vmatpush1.msra.mxu0 0.0
    %159 = vmatprep.subr.mxu0 0.0
    %160 = vmatpush1.msra.mxu0 0.0
    %161 = vmatprep.subr.mxu0 0.0
    %162 = vmatpush1.msra.mxu0 0.0
    %163 = vmatprep.subr.mxu0 0.0
    %164 = vmatpush1.msra.mxu0 0.0
    %165 = vmatprep.subr.mxu0 0.0
    %166 = vmatpush1.msra.mxu0 0.0
    %167 = vmatprep.subr.mxu0 0.0
    %168 = vmatpush1.msra.mxu0 0.0
    %169 = vmatprep.subr.mxu0 0.0
    %170 = vmatpush1.msra.mxu0 0.0
    %171 = vmatprep.subr.mxu0 0.0
    %v172 = vand.u32 %v63, 4294901760
    %v173 = vsub.f32 %v63, %v172
    %v174 = vand.u32 %v173, 4294901760
    %v175 = vsub.f32 %v173, %v174
    %v176 = vand.u32 %v175, 4294901760
    %177 = vmatpush1.msra.mxu0 %v176
    %178 = vmatprep.subr.mxu0 0.0
    %v179 = vand.u32 %v62, 4294901760
    %v180 = vsub.f32 %v62, %v179
    %v181 = vand.u32 %v180, 4294901760
    %v182 = vsub.f32 %v180, %v181
    %v183 = vand.u32 %v182, 4294901760
    %184 = vmatpush1.msra.mxu0 %v183
    %185 = vmatprep.subr.mxu0 0.0
    %v186 = vand.u32 %v61, 4294901760
    %v187 = vsub.f32 %v61, %v186
    %v188 = vand.u32 %v187, 4294901760
    %v189 = vsub.f32 %v187, %v188
    %v190 = vand.u32 %v189, 4294901760
    %191 = vmatpush1.msra.mxu0 %v190
    %192 = vmatprep.subr.mxu0 0.0
    %v193 = vand.u32 %v60, 4294901760
    %v194 = vsub.f32 %v60, %v193
    %v195 = vand.u32 %v194, 4294901760
    %v196 = vsub.f32 %v194, %v195
    %v197 = vand.u32 %v196, 4294901760
    %198 = vmatpush1.msra.mxu0 %v197
    %199 = vmatprep.subr.mxu0 0.0
    %200 = vmatpush2.msra.mxu0 0.0
    %201 = vmatprep.subr.mxu0 0.0
    %202 = vmatpush2.msra.mxu0 0.0
    %203 = vmatprep.subr.mxu0 0.0
    %204 = vmatpush2.msra.mxu0 0.0
    %205 = vmatprep.subr.mxu0 0.0
    %206 = vmatpush2.msra.mxu0 0.0
    %207 = vmatprep.subr.mxu0 0.0
    %208 = vmatpush2.msra.mxu0 0.0
    %209 = vmatprep.subr.mxu0 0.0
    %210 = vmatpush2.msra.mxu0 0.0
    %211 = vmatprep.subr.mxu0 0.0
    %212 = vmatpush2.msra.mxu0 0.0
    %213 = vmatprep.subr.mxu0 0.0
    %214 = vmatpush2.msra.mxu0 0.0
    %215 = vmatprep.subr.mxu0 0.0
    %216 = vmatpush2.msra.mxu0 0.0
    %217 = vmatprep.subr.mxu0 0.0
    %218 = vmatpush2.msra.mxu0 0.0
    %219 = vmatprep.subr.mxu0 0.0
    %220 = vmatpush2.msra.mxu0 0.0
    %221 = vmatprep.subr.mxu0 0.0
    %222 = vmatpush2.msra.mxu0 0.0
    %223 = vmatprep.subr.mxu0 0.0
    %224 = vmatpush2.msra.mxu0 0.0
    %225 = vmatprep.subr.mxu0 0.0
    %226 = vmatpush2.msra.mxu0 0.0
    %227 = vmatprep.subr.mxu0 0.0
    %228 = vmatpush2.msra.mxu0 0.0
    %229 = vmatprep.subr.mxu0 0.0
    %230 = vmatpush2.msra.mxu0 0.0
    %231 = vmatprep.mubr.f32.mxu0 0.0
    %v232 = vand.u32 %v66, 4294901760
    %233 = vmatmul.mubr.f32.gmra.mxu0 %v232
    %v234 = vpop.f32.mrf.mxu0
    %v235 = vadd.f32 %v144, %v234
    %v236 = vpop.f32.mrf.mxu0
    %237 = vdwg.mxu0
    %238 = vmatprep.subr.mxu0 0.0
    %239 = vmatpush1.msra.mxu0 0.0
    %240 = vmatprep.subr.mxu0 0.0
    %241 = vmatpush1.msra.mxu0 0.0
    %242 = vmatprep.subr.mxu0 0.0
    %243 = vmatpush1.msra.mxu0 0.0
    %244 = vmatprep.subr.mxu0 0.0
    %245 = vmatpush1.msra.mxu0 0.0
    %246 = vmatprep.subr.mxu0 0.0
    %247 = vmatpush1.msra.mxu0 0.0
    %248 = vmatprep.subr.mxu0 0.0
    %249 = vmatpush1.msra.mxu0 0.0
    %250 = vmatprep.subr.mxu0 0.0
    %251 = vmatpush1.msra.mxu0 0.0
    %252 = vmatprep.subr.mxu0 0.0
    %253 = vmatpush1.msra.mxu0 0.0
    %254 = vmatprep.subr.mxu0 0.0
    %255 = vmatpush1.msra.mxu0 0.0
    %256 = vmatprep.subr.mxu0 0.0
    %257 = vmatpush1.msra.mxu0 0.0
    %258 = vmatprep.subr.mxu0 0.0
    %259 = vmatpush1.msra.mxu0 0.0
    %260 = vmatprep.subr.mxu0 0.0
    %261 = vmatpush1.msra.mxu0 0.0
    %262 = vmatprep.subr.mxu0 0.0
    %v263 = vand.u32 %v63, 4294901760
    %v264 = vsub.f32 %v63, %v263
    %265 = vmatpush1.msra.mxu0 %v264
    %266 = vmatprep.subr.mxu0 0.0
    %v267 = vand.u32 %v62, 4294901760
    %v268 = vsub.f32 %v62, %v267
    %269 = vmatpush1.msra.mxu0 %v268
    %270 = vmatprep.subr.mxu0 0.0
    %v271 = vand.u32 %v61, 4294901760
    %v272 = vsub.f32 %v61, %v271
    %273 = vmatpush1.msra.mxu0 %v272
    %274 = vmatprep.subr.mxu0 0.0
    %v275 = vand.u32 %v60, 4294901760
    %v276 = vsub.f32 %v60, %v275
    %277 = vmatpush1.msra.mxu0 %v276
    %278 = vmatprep.subr.mxu0 0.0
    %279 = vmatpush2.msra.mxu0 0.0
    %280 = vmatprep.subr.mxu0 0.0
    %281 = vmatpush2.msra.mxu0 0.0
    %282 = vmatprep.subr.mxu0 0.0
    %283 = vmatpush2.msra.mxu0 0.0
    %284 = vmatprep.subr.mxu0 0.0
    %285 = vmatpush2.msra.mxu0 0.0
    %286 = vmatprep.subr.mxu0 0.0
    %287 = vmatpush2.msra.mxu0 0.0
    %288 = vmatprep.subr.mxu0 0.0
    %289 = vmatpush2.msra.mxu0 0.0
    %290 = vmatprep.subr.mxu0 0.0
    %291 = vmatpush2.msra.mxu0 0.0
    %292 = vmatprep.subr.mxu0 0.0
    %293 = vmatpush2.msra.mxu0 0.0
    %294 = vmatprep.subr.mxu0 0.0
    %295 = vmatpush2.msra.mxu0 0.0
    %296 = vmatprep.subr.mxu0 0.0
    %297 = vmatpush2.msra.mxu0 0.0
    %298 = vmatprep.subr.mxu0 0.0
    %299 = vmatpush2.msra.mxu0 0.0
    %300 = vmatprep.subr.mxu0 0.0
    %301 = vmatpush2.msra.mxu0 0.0
    %302 = vmatprep.subr.mxu0 0.0
    %303 = vmatpush2.msra.mxu0 0.0
    %304 = vmatprep.subr.mxu0 0.0
    %305 = vmatpush2.msra.mxu0 0.0
    %306 = vmatprep.subr.mxu0 0.0
    %307 = vmatpush2.msra.mxu0 0.0
    %308 = vmatprep.subr.mxu0 0.0
    %309 = vmatpush2.msra.mxu0 0.0
    %310 = vmatprep.mubr.f32.mxu0 0.0
    %v311 = vand.u32 %v66, 4294901760
    %v312 = vsub.f32 %v66, %v311
    %313 = vmatmul.mubr.f32.gmra.mxu0 %v312
    %v314 = vpop.f32.mrf.mxu0
    %v315 = vadd.f32 %v235, %v314
    %v316 = vpop.f32.mrf.mxu0
    %317 = vdwg.mxu0
    %318 = vmatprep.subr.mxu0 0.0
    %319 = vmatpush1.msra.mxu0 0.0
    %320 = vmatprep.subr.mxu0 0.0
    %321 = vmatpush1.msra.mxu0 0.0
    %322 = vmatprep.subr.mxu0 0.0
    %323 = vmatpush1.msra.mxu0 0.0
    %324 = vmatprep.subr.mxu0 0.0
    %325 = vmatpush1.msra.mxu0 0.0
    %326 = vmatprep.subr.mxu0 0.0
    %327 = vmatpush1.msra.mxu0 0.0
    %328 = vmatprep.subr.mxu0 0.0
    %329 = vmatpush1.msra.mxu0 0.0
    %330 = vmatprep.subr.mxu0 0.0
    %331 = vmatpush1.msra.mxu0 0.0
    %332 = vmatprep.subr.mxu0 0.0
    %333 = vmatpush1.msra.mxu0 0.0
    %334 = vmatprep.subr.mxu0 0.0
    %335 = vmatpush1.msra.mxu0 0.0
    %336 = vmatprep.subr.mxu0 0.0
    %337 = vmatpush1.msra.mxu0 0.0
    %338 = vmatprep.subr.mxu0 0.0
    %339 = vmatpush1.msra.mxu0 0.0
    %340 = vmatprep.subr.mxu0 0.0
    %341 = vmatpush1.msra.mxu0 0.0
    %342 = vmatprep.subr.mxu0 0.0
    %v343 = vand.u32 %v63, 4294901760
    %344 = vmatpush1.msra.mxu0 %v343
    %345 = vmatprep.subr.mxu0 0.0
    %v346 = vand.u32 %v62, 4294901760
    %347 = vmatpush1.msra.mxu0 %v346
    %348 = vmatprep.subr.mxu0 0.0
    %v349 = vand.u32 %v61, 4294901760
    %350 = vmatpush1.msra.mxu0 %v349
    %351 = vmatprep.subr.mxu0 0.0
    %v352 = vand.u32 %v60, 4294901760
    %353 = vmatpush1.msra.mxu0 %v352
    %354 = vmatprep.subr.mxu0 0.0
    %355 = vmatpush2.msra.mxu0 0.0
    %356 = vmatprep.subr.mxu0 0.0
    %357 = vmatpush2.msra.mxu0 0.0
    %358 = vmatprep.subr.mxu0 0.0
    %359 = vmatpush2.msra.mxu0 0.0
    %360 = vmatprep.subr.mxu0 0.0
    %361 = vmatpush2.msra.mxu0 0.0
    %362 = vmatprep.subr.mxu0 0.0
    %363 = vmatpush2.msra.mxu0 0.0
    %364 = vmatprep.subr.mxu0 0.0
    %365 = vmatpush2.msra.mxu0 0.0
    %366 = vmatprep.subr.mxu0 0.0
    %367 = vmatpush2.msra.mxu0 0.0
    %368 = vmatprep.subr.mxu0 0.0
    %369 = vmatpush2.msra.mxu0 0.0
    %370 = vmatprep.subr.mxu0 0.0
    %371 = vmatpush2.msra.mxu0 0.0
    %372 = vmatprep.subr.mxu0 0.0
    %373 = vmatpush2.msra.mxu0 0.0
    %374 = vmatprep.subr.mxu0 0.0
    %375 = vmatpush2.msra.mxu0 0.0
    %376 = vmatprep.subr.mxu0 0.0
    %377 = vmatpush2.msra.mxu0 0.0
    %378 = vmatprep.subr.mxu0 0.0
    %379 = vmatpush2.msra.mxu0 0.0
    %380 = vmatprep.subr.mxu0 0.0
    %381 = vmatpush2.msra.mxu0 0.0
    %382 = vmatprep.subr.mxu0 0.0
    %383 = vmatpush2.msra.mxu0 0.0
    %384 = vmatprep.subr.mxu0 0.0
    %385 = vmatpush2.msra.mxu0 0.0
    %386 = vmatprep.mubr.f32.mxu0 0.0
    %v387 = vand.u32 %v66, 4294901760
    %v388 = vsub.f32 %v66, %v387
    %v389 = vand.u32 %v388, 4294901760
    %390 = vmatmul.mubr.f32.gmra.mxu0 %v389
    %v391 = vpop.f32.mrf.mxu0
    %v392 = vadd.f32 %v315, %v391
    %v393 = vpop.f32.mrf.mxu0
    %394 = vdwg.mxu0
    %395 = vmatprep.subr.mxu0 0.0
    %396 = vmatpush1.msra.mxu0 0.0
    %397 = vmatprep.subr.mxu0 0.0
    %398 = vmatpush1.msra.mxu0 0.0
    %399 = vmatprep.subr.mxu0 0.0
    %400 = vmatpush1.msra.mxu0 0.0
    %401 = vmatprep.subr.mxu0 0.0
    %402 = vmatpush1.msra.mxu0 0.0
    %403 = vmatprep.subr.mxu0 0.0
    %404 = vmatpush1.msra.mxu0 0.0
    %405 = vmatprep.subr.mxu0 0.0
    %406 = vmatpush1.msra.mxu0 0.0
    %407 = vmatprep.subr.mxu0 0.0
    %408 = vmatpush1.msra.mxu0 0.0
    %409 = vmatprep.subr.mxu0 0.0
    %410 = vmatpush1.msra.mxu0 0.0
    %411 = vmatprep.subr.mxu0 0.0
    %412 = vmatpush1.msra.mxu0 0.0
    %413 = vmatprep.subr.mxu0 0.0
    %414 = vmatpush1.msra.mxu0 0.0
    %415 = vmatprep.subr.mxu0 0.0
    %416 = vmatpush1.msra.mxu0 0.0
    %417 = vmatprep.subr.mxu0 0.0
    %418 = vmatpush1.msra.mxu0 0.0
    %419 = vmatprep.subr.mxu0 0.0
    %v420 = vand.u32 %v63, 4294901760
    %v421 = vsub.f32 %v63, %v420
    %v422 = vand.u32 %v421, 4294901760
    %423 = vmatpush1.msra.mxu0 %v422
    %424 = vmatprep.subr.mxu0 0.0
    %v425 = vand.u32 %v62, 4294901760
    %v426 = vsub.f32 %v62, %v425
    %v427 = vand.u32 %v426, 4294901760
    %428 = vmatpush1.msra.mxu0 %v427
    %429 = vmatprep.subr.mxu0 0.0
    %v430 = vand.u32 %v61, 4294901760
    %v431 = vsub.f32 %v61, %v430
    %v432 = vand.u32 %v431, 4294901760
    %433 = vmatpush1.msra.mxu0 %v432
    %434 = vmatprep.subr.mxu0 0.0
    %v435 = vand.u32 %v60, 4294901760
    %v436 = vsub.f32 %v60, %v435
    %v437 = vand.u32 %v436, 4294901760
    %438 = vmatpush1.msra.mxu0 %v437
    %439 = vmatprep.subr.mxu0 0.0
    %440 = vmatpush2.msra.mxu0 0.0
    %441 = vmatprep.subr.mxu0 0.0
    %442 = vmatpush2.msra.mxu0 0.0
    %443 = vmatprep.subr.mxu0 0.0
    %444 = vmatpush2.msra.mxu0 0.0
    %445 = vmatprep.subr.mxu0 0.0
    %446 = vmatpush2.msra.mxu0 0.0
    %447 = vmatprep.subr.mxu0 0.0
    %448 = vmatpush2.msra.mxu0 0.0
    %449 = vmatprep.subr.mxu0 0.0
    %450 = vmatpush2.msra.mxu0 0.0
    %451 = vmatprep.subr.mxu0 0.0
    %452 = vmatpush2.msra.mxu0 0.0
    %453 = vmatprep.subr.mxu0 0.0
    %454 = vmatpush2.msra.mxu0 0.0
    %455 = vmatprep.subr.mxu0 0.0
    %456 = vmatpush2.msra.mxu0 0.0
    %457 = vmatprep.subr.mxu0 0.0
    %458 = vmatpush2.msra.mxu0 0.0
    %459 = vmatprep.subr.mxu0 0.0
    %460 = vmatpush2.msra.mxu0 0.0
    %461 = vmatprep.subr.mxu0 0.0
    %462 = vmatpush2.msra.mxu0 0.0
    %463 = vmatprep.subr.mxu0 0.0
    %464 = vmatpush2.msra.mxu0 0.0
    %465 = vmatprep.subr.mxu0 0.0
    %466 = vmatpush2.msra.mxu0 0.0
    %467 = vmatprep.subr.mxu0 0.0
    %468 = vmatpush2.msra.mxu0 0.0
    %469 = vmatprep.subr.mxu0 0.0
    %470 = vmatpush2.msra.mxu0 0.0
    %471 = vmatprep.mubr.f32.mxu0 0.0
    %v472 = vand.u32 %v66, 4294901760
    %473 = vmatmul.mubr.f32.gmra.mxu0 %v472
    %v474 = vpop.f32.mrf.mxu0
    %v475 = vadd.f32 %v392, %v474
    %v476 = vpop.f32.mrf.mxu0
    %477 = vdwg.mxu0
    %478 = vmatprep.subr.mxu0 0.0
    %479 = vmatpush1.msra.mxu0 0.0
    %480 = vmatprep.subr.mxu0 0.0
    %481 = vmatpush1.msra.mxu0 0.0
    %482 = vmatprep.subr.mxu0 0.0
    %483 = vmatpush1.msra.mxu0 0.0
    %484 = vmatprep.subr.mxu0 0.0
    %485 = vmatpush1.msra.mxu0 0.0
    %486 = vmatprep.subr.mxu0 0.0
    %487 = vmatpush1.msra.mxu0 0.0
    %488 = vmatprep.subr.mxu0 0.0
    %489 = vmatpush1.msra.mxu0 0.0
    %490 = vmatprep.subr.mxu0 0.0
    %491 = vmatpush1.msra.mxu0 0.0
    %492 = vmatprep.subr.mxu0 0.0
    %493 = vmatpush1.msra.mxu0 0.0
    %494 = vmatprep.subr.mxu0 0.0
    %495 = vmatpush1.msra.mxu0 0.0
    %496 = vmatprep.subr.mxu0 0.0
    %497 = vmatpush1.msra.mxu0 0.0
    %498 = vmatprep.subr.mxu0 0.0
    %499 = vmatpush1.msra.mxu0 0.0
    %500 = vmatprep.subr.mxu0 0.0
    %501 = vmatpush1.msra.mxu0 0.0
    %502 = vmatprep.subr.mxu0 0.0
    %v503 = vand.u32 %v63, 4294901760
    %504 = vmatpush1.msra.mxu0 %v503
    %505 = vmatprep.subr.mxu0 0.0
    %v506 = vand.u32 %v62, 4294901760
    %507 = vmatpush1.msra.mxu0 %v506
    %508 = vmatprep.subr.mxu0 0.0
    %v509 = vand.u32 %v61, 4294901760
    %510 = vmatpush1.msra.mxu0 %v509
    %511 = vmatprep.subr.mxu0 0.0
    %v512 = vand.u32 %v60, 4294901760
    %513 = vmatpush1.msra.mxu0 %v512
    %514 = vmatprep.subr.mxu0 0.0
    %515 = vmatpush2.msra.mxu0 0.0
    %516 = vmatprep.subr.mxu0 0.0
    %517 = vmatpush2.msra.mxu0 0.0
    %518 = vmatprep.subr.mxu0 0.0
    %519 = vmatpush2.msra.mxu0 0.0
    %520 = vmatprep.subr.mxu0 0.0
    %521 = vmatpush2.msra.mxu0 0.0
    %522 = vmatprep.subr.mxu0 0.0
    %523 = vmatpush2.msra.mxu0 0.0
    %524 = vmatprep.subr.mxu0 0.0
    %525 = vmatpush2.msra.mxu0 0.0
    %526 = vmatprep.subr.mxu0 0.0
    %527 = vmatpush2.msra.mxu0 0.0
    %528 = vmatprep.subr.mxu0 0.0
    %529 = vmatpush2.msra.mxu0 0.0
    %530 = vmatprep.subr.mxu0 0.0
    %531 = vmatpush2.msra.mxu0 0.0
    %532 = vmatprep.subr.mxu0 0.0
    %533 = vmatpush2.msra.mxu0 0.0
    %534 = vmatprep.subr.mxu0 0.0
    %535 = vmatpush2.msra.mxu0 0.0
    %536 = vmatprep.subr.mxu0 0.0
    %537 = vmatpush2.msra.mxu0 0.0
    %538 = vmatprep.subr.mxu0 0.0
    %539 = vmatpush2.msra.mxu0 0.0
    %540 = vmatprep.subr.mxu0 0.0
    %541 = vmatpush2.msra.mxu0 0.0
    %542 = vmatprep.subr.mxu0 0.0
    %543 = vmatpush2.msra.mxu0 0.0
    %544 = vmatprep.subr.mxu0 0.0
    %545 = vmatpush2.msra.mxu0 0.0
    %546 = vmatprep.mubr.f32.mxu0 0.0
    %v547 = vand.u32 %v66, 4294901760
    %548 = vmatmul.mubr.f32.gmra.mxu0 %v547
    %v549 = vpop.f32.mrf.mxu0
    %v550 = vadd.f32 %v475, %v549
    %v551 = vpop.f32.mrf.mxu0
    %552 = vdwg.mxu0
    %v555 = vunpack.c.l.s4 1966171168
    %v556 = vunpack.c.0.s8 %v555
    %v557 = vlaneseq
    %v558 = vshrl.u32 %v557, 7
    %v559 = vsub.s32 %v556, %v558
    %v560 = vrot.slane %v550, %v559
    %v561 = vcombine.high %v560, %v560
    %v563 = vunpack.c.l.s4 1966171168
    %v564 = vunpack.c.0.s8 %v563
    %v565 = vlaneseq
    %v566 = vshrl.u32 %v565, 7
    %v567 = vsub.s32 %v564, %v566
    %v568 = vrot.slane %v560, %v567
    %v570 = vunpack.c.l.s4 1966171168
    %v571 = vunpack.c.0.s8 %v570
    %v572 = vlaneseq
    %v573 = vshrl.u32 %v572, 7
    %v574 = vsub.s32 %v571, %v573
    %v575 = vrot.slane %v561, %v574
    %v576 = vlaneseq
    %v577 = vshrl.u32 %v576, 7
    %v578 = vsub.s32 0, %v577
    %v579 = vrot.slane %v568, %v578
    %v580 = vlaneseq
    %v581 = vshrl.u32 %v580, 7
    %v582 = vsub.s32 0, %v581
    %v583 = vrot.slane %v575, %v582
    %v586 = vmul.f32 %v57, %v579
    %v587 = vmul.f32 %v58, %v583
    %v588 = vsel %vm64, %v586, 0.0
    %589 = vadd.xlane.f32.xlu0 %v588
    %v590 = vpop.xlane.xlu0 %589
    %v591 = vsel %vm64, %v587, 0.0
    %592 = vadd.xlane.f32.xlu0 %v591
    %v593 = vpop.xlane.xlu0 %592
    %v596 = vlaneseq
    %v597 = vand.u32 %v596, 127
    %v598 = vlaneseq
    %v599 = vshrl.u32 %v598, 7
    %v600 = vsub.s32 %v597, %v599
    %v601 = vrot.slane %v590, %v600
    %v602 = vlaneseq
    %v603 = vshrl.u32 %v602, 7
    %v604 = vsub.s32 %v597, %v603
    %v605 = vrot.slane %v593, %v604
    %vm606 = vcmask 1041409
    %v607 = vsel %vm606, %v605, %v601
    %vm609 = vcmask 58368
    %v610 = vsel %vm609, %v607, -inf
    %611 = vmax.xlane.f32.xlu0 %v610
    %v612 = vpop.xlane.xlu0 %611
    %v614 = vlaneseq
    %v615 = vshrl.u32 %v614, 7
    %v616 = vsub.s32 0, %v615
    %v617 = vrot.slane %v612, %v616
    %v618 = vlaneseq
    %v619 = vshrl.u32 %v618, 7
    %v620 = vsub.s32 1, %v619
    %v621 = vrot.slane %v612, %v620
    %v624 = vsub.f32 %v590, %v617
    %v625 = vsub.f32 %v593, %v621
    %v626 = vmul.f32 %v624, 1.442695
    %v627 = vpow.pop %v626
    %v628 = vmul.f32 %v625, 1.442695
    %v629 = vpow.pop %v628
    %632 = vset.pattern.permute.xlu0 0
    %633 = vperm.xlu0 %632, %v627
    %v634 = vpop.permute.xlu0 %633
    %635 = vset.pattern.permute.xlu0 0
    %636 = vperm.xlu0 %635, %v629
    %v637 = vpop.permute.xlu0 %636
    %v638 = vlaneseq
    %v639 = vshrl.u32 %v638, 7
    %v640 = vsub.s32 %v597, %v639
    %v641 = vrot.slane %v634, %v640
    %v642 = vlaneseq
    %v643 = vshrl.u32 %v642, 7
    %v644 = vsub.s32 %v597, %v643
    %v645 = vrot.slane %v637, %v644
    %v646 = vsel %vm606, %v645, %v641
    %v648 = vsel %vm609, %v646, 0.0
    %649 = vadd.xlane.f32.xlu0 %v648
    %v650 = vpop.xlane.xlu0 %649
    %v652 = vlaneseq
    %v653 = vshrl.u32 %v652, 7
    %v654 = vsub.s32 0, %v653
    %v655 = vrot.slane %v650, %v654
    %v656 = vlaneseq
    %v657 = vshrl.u32 %v656, 7
    %v658 = vsub.s32 1, %v657
    %v659 = vrot.slane %v650, %v658
    %v662 = vrcp.pop %v655
    %v663 = vmul.f32 %v627, %v662
    %v664 = vrcp.pop %v659
    %v665 = vmul.f32 %v629, %v664
    %667 = vset.pattern.permute.xlu0 0
    %668 = vperm.xlu0 %667, %v663
    %v669 = vpop.permute.xlu0 %668
    %672 = vset.pattern.permute.xlu0 0
    %673 = vperm.xlu0 %672, %v665
    %v674 = vpop.permute.xlu0 %673
    %v676 = vmul.f32 %v57, %v669
    %v677 = vmul.f32 %v58, %v674
    %v678 = vsel %vm64, %v676, 0.0
    %v679 = vrot.slane %v678, 4
    %v680 = vadd.f32 %v678, %v679
    %v681 = vrot.slane %v680, 2
    %v682 = vadd.f32 %v680, %v681
    %v683 = vrot.slane %v682, 1
    %v684 = vadd.f32 %v682, %v683
    %v685 = vsel %vm64, %v677, 0.0
    %v686 = vrot.slane %v685, 4
    %v687 = vadd.f32 %v685, %v686
    %v688 = vrot.slane %v687, 2
    %v689 = vadd.f32 %v687, %v688
    %v690 = vrot.slane %v689, 1
    %v691 = vadd.f32 %v689, %v690
    %v694 = vsel %vm606, %v691, %v684
    %v696 = vsel %vm64, %v694, 0.0
    %v697 = vlaneseq
    %v698 = vshrl.u32 %v697, 7
    %v699 = vsub.s32 %v597, %v698
    %v700 = vrot.slane %v669, %v699
    %v701 = vlaneseq
    %v702 = vshrl.u32 %v701, 7
    %v703 = vsub.s32 %v597, %v702
    %v704 = vrot.slane %v674, %v703
    %v705 = vsel %vm606, %v704, %v700
    %vm707 = vcmask 64512
    %v708 = vsel %vm707, %v705, 0.0
    %709 = vst [vmem:[#allocation8] sm:$0x3] %v696
    %710 = vst [vmem:[#allocation9] sm:$0x3] %v708
    // Predicated region
    $region26: #{tpu_custom_call.1} parent=1 // pred_check
      _
    $region27: #{tpu_custom_call.1} parent=1 // pred_check_branch
      %712 = sbr.rel (0) target = $region29
    $region28: #{tpu_custom_call.1} parent=1 // pred_region
      %s714 = ssub.s32 32, 32
      %715 = vsyncadd [#allocation4], %s714
      %s717 = sshll.u32 [#allocation8], 4
      %s718 = int_to_ptr.vmem [resolvable:$true] %s717
      %720 = dma.vmem_to_hbm [thread:$0]  %s718, 32, %s3, [#allocation4]
    $region29: #{tpu_custom_call.1} parent=1 // pred_fallthru
      _
    // Predicated region
    $region30: #{tpu_custom_call.1} parent=1 // pred_check
      _
    $region31: #{tpu_custom_call.1} parent=1 // pred_check_branch
      %722 = sbr.rel (0) target = $region33
    $region32: #{tpu_custom_call.1} parent=1 // pred_region
      %s724 = ssub.s32 32, 32
      %725 = vsyncadd [#allocation10], %s724
      %s727 = sshll.u32 [#allocation9], 4
      %s728 = int_to_ptr.vmem [resolvable:$true] %s727
      %730 = dma.vmem_to_hbm [thread:$0]  %s728, 32, %s4, [#allocation10]
    $region33: #{tpu_custom_call.1} parent=1 // pred_fallthru
      _
    // Predicated region
    $region34: #{tpu_custom_call.1} parent=1 // pred_check
      _
    $region35: #{tpu_custom_call.1} parent=1 // pred_check_branch
      %732 = sbr.rel (0) target = $region37
    $region36: #{tpu_custom_call.1} parent=1 // pred_region
      %733 = dma.done [#allocation4], 32
    $region37: #{tpu_custom_call.1} parent=1 // pred_fallthru
      _
    // Predicated region
    $region38: #{tpu_custom_call.1} parent=1 // pred_check
      _
    $region39: #{tpu_custom_call.1} parent=1 // pred_check_branch
      %735 = sbr.rel (0) target = $region41
    $region40: #{tpu_custom_call.1} parent=1 // pred_region
      %736 = dma.done [#allocation10], 32
    $region41: #{tpu_custom_call.1} parent=1 // pred_fallthru
      _
    %737 = vsyncpa [#allocation3], 1
    %738 = vsyncpa [#allocation6], 1
    %739 = vsyncpa [#allocation4], 1
    %740 = vsyncpa [#allocation10], 1

</llo_original>
